<compile_context>
chip_gen: v5e
topology: v5e:2x2
jax: 0.10.0
libtpu: 0.0.40
codegen_flags: <defaults>
</compile_context>

<pallas_src>
import jax
import jax.numpy as jnp
from jax.experimental import pallas as pl
from jax.experimental.pallas import tpu as pltpu

_LANE = 128
_SUBLANE = 8
_NEG_BIG = -1.0e30  # padded-class bias: exp(-1e30 - m) underflows to 0, no inf/nan


def _round_up(x, m):
    return ((x + m - 1) // m) * m


def _vmem_capacity_bytes():
    try:
        return int(pltpu.get_tpu_info().vmem_capacity_bytes)
    except Exception:
        return 64 << 20  # conservative fallback: v7x per-TC VMEM


def _classifier_kernel(x_ref, w1_ref, b1_ref, w2_ref, b2_ref, o_ref):
    # fc1 (+bias, ReLU).  bf16 operands on the MXU, f32 accumulation.
    x = x_ref[...].astype(jnp.bfloat16)
    h = jnp.dot(x, w1_ref[...], preferred_element_type=jnp.float32)
    h = jnp.maximum(h + b1_ref[...], 0.0)
    # fc2: padded class columns carry a -1e30 bias -> vanish in the softmax.
    z = jnp.dot(h.astype(jnp.bfloat16), w2_ref[...],
                preferred_element_type=jnp.float32) + b2_ref[...]
    # log_softmax over the (lane-dense, padded) class dimension.
    m = jnp.max(z, axis=-1, keepdims=True)
    shifted = z - m
    lse = jnp.log(jnp.sum(jnp.exp(shifted), axis=-1, keepdims=True))
    logp = shifted - lse
    # Store only the real classes (narrow store: minimal HBM write bytes,
    # no wrapper-side slice pass).
    o_ref[...] = logp[:, : o_ref.shape[-1]].astype(o_ref.dtype)


def prepare_classifier_params(w1, b1, w2, b2, *, param_dtype=jnp.bfloat16):
    """Pad + cast the weights ONCE at model setup (hoisted out of the hot path).

    w1: (input_size, hidden)   (transpose of torch fc1.weight)
    b1: (hidden,)
    w2: (hidden, num_classes)  (transpose of torch fc2.weight)
    b2: (num_classes,)
    """
    input_size, hidden = w1.shape
    num_classes = w2.shape[1]
    hpad = _round_up(hidden, _LANE)
    cpad = _round_up(num_classes, _LANE)
    w1_p = jnp.zeros((input_size, hpad), param_dtype).at[:, :hidden].set(
        w1.astype(param_dtype))
    b1_p = jnp.zeros((1, hpad), jnp.float32).at[0, :hidden].set(
        b1.astype(jnp.float32))
    w2_p = jnp.zeros((hpad, cpad), param_dtype).at[:hidden, :num_classes].set(
        w2.astype(param_dtype))
    b2_p = jnp.full((1, cpad), _NEG_BIG, jnp.float32).at[0, :num_classes].set(
        b2.astype(jnp.float32))
    return {
        "w1": w1_p, "b1": b1_p, "w2": w2_p, "b2": b2_p,
        "input_size": input_size, "hidden": hidden,
        "num_classes": num_classes, "hpad": hpad, "cpad": cpad,
    }


def _choose_tb(B, input_size, hpad, cpad, num_classes, x_bytes, vmem, resident):
    """Largest batch tile that fits a conservative, chip-aware VMEM budget."""
    budget = int(0.5 * vmem) - resident - (4 << 20)
    per_row = (2 * input_size * x_bytes      # double-buffered x tile
               + 2 * num_classes * 4         # double-buffered out tile
               + (hpad + cpad) * 4)          # f32 h / z intermediates
    tb = max(_SUBLANE, budget // max(per_row, 1))
    tb = min(tb, 2048)
    if B > 2 * _SUBLANE:
        # Keep >= 2 grid steps so the "parallel" batch axis can shard across
        # both TensorCores (v7x megacore); negligible cost on v5e/v6e.
        tb = min(tb, _round_up(-(-B // 2), _SUBLANE))
    tb = min(tb, _round_up(B, _SUBLANE))
    return max(_SUBLANE, (tb // _SUBLANE) * _SUBLANE)


def classifier_forward(inputs, params):
    """Pallas equivalent of Classifier.forward.

    inputs: (B, input_size) or (1, B, input_size)
    params: output of prepare_classifier_params
    returns: (B, num_classes) log-probabilities, float32
    """
    if inputs.ndim == 3:
        if inputs.shape[0] != 1:
            # TODO(synk): torch's squeeze(0) is a no-op for leading dim > 1
            # (batched linear + log_softmax over dim=1); not supported here.
            raise ValueError("3-D inputs must have a leading dimension of 1")
        inputs = inputs[0]

    B, input_size = inputs.shape
    assert input_size == params["input_size"]
    hpad, cpad = params["hpad"], params["cpad"]
    num_classes = params["num_classes"]
    x_bytes = jnp.dtype(inputs.dtype).itemsize
    w_bytes = jnp.dtype(params["w1"].dtype).itemsize

    vmem = _vmem_capacity_bytes()
    resident = w_bytes * (input_size * hpad + hpad * cpad) + 4 * (hpad + cpad)
    tb = _choose_tb(B, input_size, hpad, cpad, num_classes, x_bytes, vmem, resident)
    grid = (pl.cdiv(B, tb),)

    # Honest footprint (no double-counted 2x) + fixed headroom, chip-aware cap.
    footprint = (resident
                 + 2 * tb * input_size * x_bytes
                 + 2 * tb * num_classes * 4
                 + tb * (hpad + cpad) * 4)
    cap = min(int(0.75 * vmem), 100 << 20)
    vmem_limit = int(min(max(footprint + (8 << 20), 32 << 20), cap))

    cost = pl.CostEstimate(
        flops=2 * B * (input_size * hpad + hpad * cpad),
        transcendentals=B * (cpad + 1),
        bytes_accessed=(x_bytes * B * input_size
                        + w_bytes * (input_size * hpad + hpad * cpad)
                        + 4 * (hpad + cpad)
                        + 4 * B * num_classes),
    )

    def _call(single_buffer_weights):
        if single_buffer_weights:
            def res(shape):
                return pl.BlockSpec(shape, lambda i: (0, 0),
                                    pipeline_mode=pl.Buffered(1))
        else:
            def res(shape):
                return pl.BlockSpec(shape, lambda i: (0, 0))

        grid_spec = pltpu.PrefetchScalarGridSpec(
            num_scalar_prefetch=0,
            grid=grid,
            in_specs=[
                pl.BlockSpec((tb, input_size), lambda i: (i, 0)),  # x tile
                res((input_size, hpad)),                           # w1 (resident)
                res((1, hpad)),                                    # b1 (resident)
                res((hpad, cpad)),                                 # w2 (resident)
                res((1, cpad)),                                    # b2 (resident)
            ],
            out_specs=pl.BlockSpec((tb, num_classes), lambda i: (i, 0)),
        )
        return pl.pallas_call(
            _classifier_kernel,
            out_shape=jax.ShapeDtypeStruct((B, num_classes), jnp.float32),
            grid_spec=grid_spec,
            compiler_params=pltpu.CompilerParams(
                dimension_semantics=("parallel",),
                vmem_limit_bytes=vmem_limit,
            ),
            cost_estimate=cost,
        )(inputs, params["w1"], params["b1"], params["w2"], params["b2"])

    try:
        # Single-buffer the grid-invariant weights (halves their VMEM footprint).
        return _call(True)
    except Exception:
        # Fallback if this Pallas build rejects pipeline_mode on BlockSpec.
        return _call(False)

    # TODO(synk): for very large num_classes, add a second ("arbitrary") grid
    # axis tiling w2/b2 columns with an online logsumexp; not needed at these sizes.


def _reference_forward_f32(x, w1, b1, w2, b2):
    h = jnp.maximum(x @ w1 + b1, 0.0)
    return jax.nn.log_softmax(h @ w2 + b2, axis=-1)


def _reference_forward_bf16(x, w1, b1, w2, b2):
    # Mirrors the kernel's bf16-operand / f32-accumulation numerics.
    xb = x.astype(jnp.bfloat16)
    w1b = w1.astype(jnp.bfloat16)
    w2b = w2.astype(jnp.bfloat16)
    h = jnp.dot(xb, w1b, preferred_element_type=jnp.float32) + b1
    h = jnp.maximum(h, 0.0)
    z = jnp.dot(h.astype(jnp.bfloat16), w2b, preferred_element_type=jnp.float32) + b2
    return jax.nn.log_softmax(z, axis=-1)


if __name__ == "__main__":
    key = jax.random.PRNGKey(0)
    k_x, k_w1, k_b1, k_w2, k_b2, k_x2 = jax.random.split(key, 6)

    batch, input_size, hidden_size, num_classes = 8, 32, 32, 16

    # Deterministic synthetic parameters (nn.Linear-style uniform fan-in init).
    lim1 = 1.0 / (input_size ** 0.5)
    lim2 = 1.0 / (hidden_size ** 0.5)
    w1 = jax.random.uniform(k_w1, (input_size, hidden_size), jnp.float32, -lim1, lim1)
    b1 = jax.random.uniform(k_b1, (hidden_size,), jnp.float32, -lim1, lim1)
    w2 = jax.random.uniform(k_w2, (hidden_size, num_classes), jnp.float32, -lim2, lim2)
    b2 = jax.random.uniform(k_b2, (num_classes,), jnp.float32, -lim2, lim2)

    params = prepare_classifier_params(w1, b1, w2, b2)

    x = jax.random.normal(k_x, (batch, input_size), jnp.float32)
    out = jax.block_until_ready(classifier_forward(x, params))
    ref_bf = _reference_forward_bf16(x, w1, b1, w2, b2)
    ref_32 = _reference_forward_f32(x, w1, b1, w2, b2)
    assert out.shape == (batch, num_classes)
    assert bool(jnp.all(jnp.isfinite(out)))
    assert jnp.allclose(out, ref_bf, atol=5e-3, rtol=5e-3)
    assert jnp.allclose(out, ref_32, atol=5e-2, rtol=5e-2)

    # 3-D input path (squeeze(0) semantics).
    out3 = jax.block_until_ready(classifier_forward(x[None, ...], params))
    assert jnp.allclose(out3, ref_bf, atol=5e-3, rtol=5e-3)

    # Ragged batch (not a multiple of the batch tile): exercises the masked
    # last-block read/write path with no wrapper-side pad or slice.
    x_big = jax.random.normal(k_x2, (37, input_size), jnp.float32)
    out_big = jax.block_until_ready(classifier_forward(x_big, params))
    ref_big = _reference_forward_bf16(x_big, w1, b1, w2, b2)
    assert out_big.shape == (37, num_classes)
    assert bool(jnp.all(jnp.isfinite(out_big)))
    assert jnp.allclose(out_big, ref_big, atol=5e-3, rtol=5e-3)

    print("KERNEL_OK")
</pallas_src>

<mosaic_0001>
module attributes {stable_mosaic.version = 11 : i64} {
  func.func @_classifier_kernel(%arg0: i32, %arg1: memref<8x32xf32, #tpu.memory_space<vmem>>, %arg2: memref<32x128xbf16, #tpu.memory_space<vmem>>, %arg3: memref<1x128xf32, #tpu.memory_space<vmem>>, %arg4: memref<128x128xbf16, #tpu.memory_space<vmem>>, %arg5: memref<1x128xf32, #tpu.memory_space<vmem>>, %arg6: memref<8x16xf32, #tpu.memory_space<vmem>>) attributes {dimension_semantics = [#tpu.dimension_semantics<parallel>], iteration_bounds = array<i64: 1>, scalar_prefetch = 0 : i64, scratch_operands = 0 : i64, tpu.core_type = #tpu.core_type<tc>, window_params = [{transform_indices = @transform_0, window_bounds = array<i64: 8, 32>}, {pipeline_mode = #tpu.pipeline_mode<synchronous>, transform_indices = @transform_1, window_bounds = array<i64: 32, 128>}, {pipeline_mode = #tpu.pipeline_mode<synchronous>, transform_indices = @transform_2, window_bounds = array<i64: 1, 128>}, {pipeline_mode = #tpu.pipeline_mode<synchronous>, transform_indices = @transform_3, window_bounds = array<i64: 128, 128>}, {pipeline_mode = #tpu.pipeline_mode<synchronous>, transform_indices = @transform_4, window_bounds = array<i64: 1, 128>}, {transform_indices = @transform_5, window_bounds = array<i64: 8, 16>}]} {
    %c0 = arith.constant 0 : index
    %c0_0 = arith.constant 0 : index
    %0 = vector.load %arg1[%c0, %c0_0] : memref<8x32xf32, #tpu.memory_space<vmem>>, vector<8x32xf32>
    %1 = arith.truncf %0 : vector<8x32xf32> to vector<8x32xbf16>
    %c0_1 = arith.constant 0 : index
    %c0_2 = arith.constant 0 : index
    %2 = vector.load %arg2[%c0_1, %c0_2] : memref<32x128xbf16, #tpu.memory_space<vmem>>, vector<32x128xbf16>
    %cst = arith.constant dense<0.000000e+00> : vector<8x128xf32>
    %3 = tpu.matmul %1, %2, %cst {dimension_numbers = #tpu.dot_dimension_numbers<[1], [0], [0], [1], [0, 0, 1, 1], [], []>} : vector<8x32xbf16>, vector<32x128xbf16>, vector<8x128xf32> -> vector<8x128xf32>
    %c0_3 = arith.constant 0 : index
    %c0_4 = arith.constant 0 : index
    %4 = vector.load %arg3[%c0_3, %c0_4] : memref<1x128xf32, #tpu.memory_space<vmem>>, vector<1x128xf32>
    %5 = vector.broadcast %4 : vector<1x128xf32> to vector<8x128xf32>
    %6 = arith.addf %3, %5 : vector<8x128xf32>
    %cst_5 = arith.constant 0.000000e+00 : f32
    %7 = vector.broadcast %cst_5 : f32 to vector<8x128xf32>
    %8 = arith.maximumf %6, %7 : vector<8x128xf32>
    %9 = arith.truncf %8 : vector<8x128xf32> to vector<8x128xbf16>
    %c0_6 = arith.constant 0 : index
    %c0_7 = arith.constant 0 : index
    %10 = vector.load %arg4[%c0_6, %c0_7] : memref<128x128xbf16, #tpu.memory_space<vmem>>, vector<128x128xbf16>
    %cst_8 = arith.constant dense<0.000000e+00> : vector<8x128xf32>
    %11 = tpu.matmul %9, %10, %cst_8 {dimension_numbers = #tpu.dot_dimension_numbers<[1], [0], [0], [1], [0, 0, 1, 1], [], []>} : vector<8x128xbf16>, vector<128x128xbf16>, vector<8x128xf32> -> vector<8x128xf32>
    %c0_9 = arith.constant 0 : index
    %c0_10 = arith.constant 0 : index
    %12 = vector.load %arg5[%c0_9, %c0_10] : memref<1x128xf32, #tpu.memory_space<vmem>>, vector<1x128xf32>
    %13 = vector.broadcast %12 : vector<1x128xf32> to vector<8x128xf32>
    %14 = arith.addf %11, %13 : vector<8x128xf32>
    %cst_11 = arith.constant dense<0xFF800000> : vector<8xf32>
    %15 = vector.multi_reduction <maximumf>, %14, %cst_11 [1] : vector<8x128xf32> to vector<8xf32>
    %16 = vector.shape_cast %15 : vector<8xf32> to vector<8x1xf32>
    %17 = vector.broadcast %16 : vector<8x1xf32> to vector<8x128xf32>
    %18 = arith.subf %14, %17 : vector<8x128xf32>
    %19 = math.exp %18 : vector<8x128xf32>
    %cst_12 = arith.constant dense<0.000000e+00> : vector<8xf32>
    %20 = vector.multi_reduction <add>, %19, %cst_12 [1] : vector<8x128xf32> to vector<8xf32>
    %21 = vector.shape_cast %20 : vector<8xf32> to vector<8x1xf32>
    %22 = math.log %21 : vector<8x1xf32>
    %23 = vector.broadcast %22 : vector<8x1xf32> to vector<8x128xf32>
    %24 = arith.subf %18, %23 : vector<8x128xf32>
    %25 = vector.extract_strided_slice %24 {offsets = [0, 0], sizes = [8, 16], strides = [1, 1]} : vector<8x128xf32> to vector<8x16xf32>
    %c0_13 = arith.constant 0 : index
    %c0_14 = arith.constant 0 : index
    %26 = vector.load %arg6[%c0_13, %c0_14] : memref<8x16xf32, #tpu.memory_space<vmem>>, vector<8x16xf32>
    tpu.vector_store %arg6[%c0_13, %c0_14], %25 {strides = array<i32>} : memref<8x16xf32, #tpu.memory_space<vmem>>, vector<8x16xf32>,
    return
  }
  func.func @transform_0(%arg0: i32) -> (i32, i32) {
    %c0_i32 = arith.constant 0 : i32
    %c0_i32_0 = arith.constant 0 : i32
    return %arg0, %c0_i32 : i32, i32
  }
  func.func @transform_1(%arg0: i32) -> (i32, i32) {
    %c0_i32 = arith.constant 0 : i32
    %c0_i32_0 = arith.constant 0 : i32
    %c0_i32_1 = arith.constant 0 : i32
    return %c0_i32, %c0_i32_0 : i32, i32
  }
  func.func @transform_2(%arg0: i32) -> (i32, i32) {
    %c0_i32 = arith.constant 0 : i32
    %c0_i32_0 = arith.constant 0 : i32
    %c0_i32_1 = arith.constant 0 : i32
    return %c0_i32, %c0_i32_0 : i32, i32
  }
  func.func @transform_3(%arg0: i32) -> (i32, i32) {
    %c0_i32 = arith.constant 0 : i32
    %c0_i32_0 = arith.constant 0 : i32
    %c0_i32_1 = arith.constant 0 : i32
    return %c0_i32, %c0_i32_0 : i32, i32
  }
  func.func @transform_4(%arg0: i32) -> (i32, i32) {
    %c0_i32 = arith.constant 0 : i32
    %c0_i32_0 = arith.constant 0 : i32
    %c0_i32_1 = arith.constant 0 : i32
    return %c0_i32, %c0_i32_0 : i32, i32
  }
  func.func @transform_5(%arg0: i32) -> (i32, i32) {
    %c0_i32 = arith.constant 0 : i32
    %c0_i32_0 = arith.constant 0 : i32
    return %arg0, %c0_i32 : i32, i32
  }
}

module attributes {stable_mosaic.version = 11 : i64} {
  func.func @_classifier_kernel(%arg0: i32, %arg1: memref<8x32xf32, #tpu.memory_space<vmem>>, %arg2: memref<32x128xbf16, #tpu.memory_space<vmem>>, %arg3: memref<1x128xf32, #tpu.memory_space<vmem>>, %arg4: memref<128x128xbf16, #tpu.memory_space<vmem>>, %arg5: memref<1x128xf32, #tpu.memory_space<vmem>>, %arg6: memref<8x16xf32, #tpu.memory_space<vmem>>) attributes {dimension_semantics = [#tpu.dimension_semantics<parallel>], iteration_bounds = array<i64: 1>, scalar_prefetch = 0 : i64, scratch_operands = 0 : i64, tpu.core_type = #tpu.core_type<tc>, window_params = [{transform_indices = @transform_0, window_bounds = array<i64: 8, 32>}, {pipeline_mode = #tpu.pipeline_mode<synchronous>, transform_indices = @transform_1, window_bounds = array<i64: 32, 128>}, {pipeline_mode = #tpu.pipeline_mode<synchronous>, transform_indices = @transform_2, window_bounds = array<i64: 1, 128>}, {pipeline_mode = #tpu.pipeline_mode<synchronous>, transform_indices = @transform_3, window_bounds = array<i64: 128, 128>}, {pipeline_mode = #tpu.pipeline_mode<synchronous>, transform_indices = @transform_4, window_bounds = array<i64: 1, 128>}, {transform_indices = @transform_5, window_bounds = array<i64: 8, 16>}]} {
    %c0 = arith.constant 0 : index
    %c0_0 = arith.constant 0 : index
    %0 = vector.load %arg1[%c0, %c0_0] : memref<8x32xf32, #tpu.memory_space<vmem>>, vector<8x32xf32>
    %1 = arith.truncf %0 : vector<8x32xf32> to vector<8x32xbf16>
    %c0_1 = arith.constant 0 : index
    %c0_2 = arith.constant 0 : index
    %2 = vector.load %arg2[%c0_1, %c0_2] : memref<32x128xbf16, #tpu.memory_space<vmem>>, vector<32x128xbf16>
    %cst = arith.constant dense<0.000000e+00> : vector<8x128xf32>
    %3 = tpu.matmul %1, %2, %cst {dimension_numbers = #tpu.dot_dimension_numbers<[1], [0], [0], [1], [0, 0, 1, 1], [], []>} : vector<8x32xbf16>, vector<32x128xbf16>, vector<8x128xf32> -> vector<8x128xf32>
    %c0_3 = arith.constant 0 : index
    %c0_4 = arith.constant 0 : index
    %4 = vector.load %arg3[%c0_3, %c0_4] : memref<1x128xf32, #tpu.memory_space<vmem>>, vector<1x128xf32>
    %5 = vector.broadcast %4 : vector<1x128xf32> to vector<8x128xf32>
    %6 = arith.addf %3, %5 : vector<8x128xf32>
    %cst_5 = arith.constant 0.000000e+00 : f32
    %7 = vector.broadcast %cst_5 : f32 to vector<8x128xf32>
    %8 = arith.maximumf %6, %7 : vector<8x128xf32>
    %9 = arith.truncf %8 : vector<8x128xf32> to vector<8x128xbf16>
    %c0_6 = arith.constant 0 : index
    %c0_7 = arith.constant 0 : index
    %10 = vector.load %arg4[%c0_6, %c0_7] : memref<128x128xbf16, #tpu.memory_space<vmem>>, vector<128x128xbf16>
    %cst_8 = arith.constant dense<0.000000e+00> : vector<8x128xf32>
    %11 = tpu.matmul %9, %10, %cst_8 {dimension_numbers = #tpu.dot_dimension_numbers<[1], [0], [0], [1], [0, 0, 1, 1], [], []>} : vector<8x128xbf16>, vector<128x128xbf16>, vector<8x128xf32> -> vector<8x128xf32>
    %c0_9 = arith.constant 0 : index
    %c0_10 = arith.constant 0 : index
    %12 = vector.load %arg5[%c0_9, %c0_10] : memref<1x128xf32, #tpu.memory_space<vmem>>, vector<1x128xf32>
    %13 = vector.broadcast %12 : vector<1x128xf32> to vector<8x128xf32>
    %14 = arith.addf %11, %13 : vector<8x128xf32>
    %cst_11 = arith.constant dense<0xFF800000> : vector<8xf32>
    %15 = vector.multi_reduction <maximumf>, %14, %cst_11 [1] : vector<8x128xf32> to vector<8xf32>
    %16 = vector.shape_cast %15 : vector<8xf32> to vector<8x1xf32>
    %17 = vector.broadcast %16 : vector<8x1xf32> to vector<8x128xf32>
    %18 = arith.subf %14, %17 : vector<8x128xf32>
    %19 = math.exp %18 : vector<8x128xf32>
    %cst_12 = arith.constant dense<0.000000e+00> : vector<8xf32>
    %20 = vector.multi_reduction <add>, %19, %cst_12 [1] : vector<8x128xf32> to vector<8xf32>
    %21 = vector.shape_cast %20 : vector<8xf32> to vector<8x1xf32>
    %22 = math.log %21 : vector<8x1xf32>
    %23 = vector.broadcast %22 : vector<8x1xf32> to vector<8x128xf32>
    %24 = arith.subf %18, %23 : vector<8x128xf32>
    %25 = vector.extract_strided_slice %24 {offsets = [0, 0], sizes = [8, 16], strides = [1, 1]} : vector<8x128xf32> to vector<8x16xf32>
    %c0_13 = arith.constant 0 : index
    %c0_14 = arith.constant 0 : index
    %26 = vector.load %arg6[%c0_13, %c0_14] : memref<8x16xf32, #tpu.memory_space<vmem>>, vector<8x16xf32>
    tpu.vector_store %arg6[%c0_13, %c0_14], %25 {strides = array<i32>} : memref<8x16xf32, #tpu.memory_space<vmem>>, vector<8x16xf32>,
    return
  }
  func.func @transform_0(%arg0: i32) -> (i32, i32) {
    %c0_i32 = arith.constant 0 : i32
    %c0_i32_0 = arith.constant 0 : i32
    return %arg0, %c0_i32 : i32, i32
  }
  func.func @transform_1(%arg0: i32) -> (i32, i32) {
    %c0_i32 = arith.constant 0 : i32
    %c0_i32_0 = arith.constant 0 : i32
    %c0_i32_1 = arith.constant 0 : i32
    return %c0_i32, %c0_i32_0 : i32, i32
  }
  func.func @transform_2(%arg0: i32) -> (i32, i32) {
    %c0_i32 = arith.constant 0 : i32
    %c0_i32_0 = arith.constant 0 : i32
    %c0_i32_1 = arith.constant 0 : i32
    return %c0_i32, %c0_i32_0 : i32, i32
  }
  func.func @transform_3(%arg0: i32) -> (i32, i32) {
    %c0_i32 = arith.constant 0 : i32
    %c0_i32_0 = arith.constant 0 : i32
    %c0_i32_1 = arith.constant 0 : i32
    return %c0_i32, %c0_i32_0 : i32, i32
  }
  func.func @transform_4(%arg0: i32) -> (i32, i32) {
    %c0_i32 = arith.constant 0 : i32
    %c0_i32_0 = arith.constant 0 : i32
    %c0_i32_1 = arith.constant 0 : i32
    return %c0_i32, %c0_i32_0 : i32, i32
  }
  func.func @transform_5(%arg0: i32) -> (i32, i32) {
    %c0_i32 = arith.constant 0 : i32
    %c0_i32_0 = arith.constant 0 : i32
    return %arg0, %c0_i32 : i32, i32
  }
}

</mosaic_0001>

<llo_original>
// kernel: tpu_custom_call.1
$region0: #{tpu_custom_call.1}
  #allocation0 [shape = 'u32[]', space=smem, size = 0x4, offset = 0x4, fixed_abs, tag = 'smem constant byte address 0x4 - core index']
  #allocation1 [shape = 'u32[72,128]{1,0:T(1,128)}', space=vmem, size = 0x9000, scoped, tag = 'internal scratch']
  %s0 = inlined_call_operand.hbm [shape: f32[8,32], index: 0, kind: input, shape index: {}]
  %s1 = inlined_call_operand.hbm [shape: bf16[32,128], index: 1, kind: input, shape index: {}]
  %s2 = inlined_call_operand.vmem [shape: f32[1,128], index: 2, kind: input, shape index: {}]
  %s3 = inlined_call_operand.hbm [shape: bf16[128,128], index: 3, kind: input, shape index: {}]
  %s4 = inlined_call_operand.vmem [shape: f32[1,128], index: 4, kind: input, shape index: {}]
  %s5 = inlined_call_operand.hbm [shape: f32[8,16], index: 5, kind: output, shape index: {}]
  %s6 = sld [smem:[#allocation0]]
  $region42: #{tpu_custom_call.1} parent=0
    _
  %s8 = ssub.s32 1, %s6
  %s9 = scalar_select 0, %s8, %s6
  $region1: #{tpu_custom_call.1} parent=0
    #allocation2 [shape = 'u8[4096]{0}', space=vmem, size = 0x1000, scoped, tag = 'input window, operand 0, single buffered']
    #allocation3 [shape = 's32[1]{0}', space=sflag, size = 0x4, scoped, tag = 'scoped memory for tpu_custom_call.1']
    #allocation4 [shape = 's32[1]{0}', space=sflag, size = 0x4, scoped, tag = 'scoped memory for tpu_custom_call.1']
    #allocation5 [shape = 'u8[8192]{0}', space=vmem, size = 0x2000, scoped, tag = 'input window, operand 1, single buffered']
    #allocation6 [shape = 's32[1]{0}', space=sflag, size = 0x4, scoped, tag = 'scoped memory for tpu_custom_call.1']
    #allocation7 [shape = 'u8[32768]{0}', space=vmem, size = 0x8000, scoped, tag = 'input window, operand 3, single buffered']
    #allocation8 [shape = 'u8[4096]{0}', space=vmem, size = 0x1000, scoped, tag = 'output window, operand 0, single buffered']
    %10 = vsyncpa [#allocation3], 0
    %11 = vsyncpa [#allocation6], 0
    %12 = vsyncpa [#allocation4], 0
    // Predicated region
    $region2: #{tpu_custom_call.1} parent=1 // pred_check
      _
    $region3: #{tpu_custom_call.1} parent=1 // pred_check_branch
      %14 = sbr.rel (0) target = $region5
    $region4: #{tpu_custom_call.1} parent=1 // pred_region
      %16 = vsyncadd [#allocation3], 0
      %s18 = sshll.u32 %s0, 4
      %s19 = int_to_ptr.hbm [resolvable:$true] %s18
      %s20 = sshll.u32 [#allocation2], 4
      %s21 = int_to_ptr.vmem [resolvable:$true] %s20
      %23 = dma.hbm_to_vmem [thread:$0]  %s19, 128, %s21, [#allocation3]
    $region5: #{tpu_custom_call.1} parent=1 // pred_fallthru
      _
    // Predicated region
    $region6: #{tpu_custom_call.1} parent=1 // pred_check
      _
    $region7: #{tpu_custom_call.1} parent=1 // pred_check_branch
      %25 = sbr.rel (0) target = $region9
    $region8: #{tpu_custom_call.1} parent=1 // pred_region
      %27 = vsyncadd [#allocation6], 0
      %s28 = sshll.u32 %s1, 4
      %s29 = int_to_ptr.hbm [resolvable:$true] %s28
      %s30 = sshll.u32 [#allocation5], 4
      %s31 = int_to_ptr.vmem [resolvable:$true] %s30
      %36 = dma.hbm_to_vmem [thread:$0]  %s29, 256, %s31, [#allocation6], 64, 64, 4
    $region9: #{tpu_custom_call.1} parent=1 // pred_fallthru
      _
    // Predicated region
    $region10: #{tpu_custom_call.1} parent=1 // pred_check
      _
    $region11: #{tpu_custom_call.1} parent=1 // pred_check_branch
      %38 = sbr.rel (0) target = $region13
    $region12: #{tpu_custom_call.1} parent=1 // pred_region
      _
    $region13: #{tpu_custom_call.1} parent=1 // pred_fallthru
      _
    // Predicated region
    $region14: #{tpu_custom_call.1} parent=1 // pred_check
      _
    $region15: #{tpu_custom_call.1} parent=1 // pred_check_branch
      %40 = sbr.rel (0) target = $region17
    $region16: #{tpu_custom_call.1} parent=1 // pred_region
      %42 = vsyncadd [#allocation6], 0
      %s43 = sshll.u32 %s3, 4
      %s44 = int_to_ptr.hbm [resolvable:$true] %s43
      %s45 = sshll.u32 [#allocation7], 4
      %s46 = int_to_ptr.vmem [resolvable:$true] %s45
      %51 = dma.hbm_to_vmem [thread:$0]  %s44, 1024, %s46, [#allocation6], 64, 64, 4
    $region17: #{tpu_custom_call.1} parent=1 // pred_fallthru
      _
    // Predicated region
    $region18: #{tpu_custom_call.1} parent=1 // pred_check
      _
    $region19: #{tpu_custom_call.1} parent=1 // pred_check_branch
      %53 = sbr.rel (0) target = $region21
    $region20: #{tpu_custom_call.1} parent=1 // pred_region
      _
    $region21: #{tpu_custom_call.1} parent=1 // pred_fallthru
      _
    // Predicated region
    $region22: #{tpu_custom_call.1} parent=1 // pred_check
      _
    $region23: #{tpu_custom_call.1} parent=1 // pred_check_branch
      %55 = sbr.rel (0) target = $region25
    $region24: #{tpu_custom_call.1} parent=1 // pred_region
      %57 = dma.done [#allocation3], 128
    $region25: #{tpu_custom_call.1} parent=1 // pred_fallthru
      _
    // Predicated region
    $region26: #{tpu_custom_call.1} parent=1 // pred_check
      _
    $region27: #{tpu_custom_call.1} parent=1 // pred_check_branch
      %59 = sbr.rel (0) target = $region29
    $region28: #{tpu_custom_call.1} parent=1 // pred_region
      %61 = dma.done [#allocation6], 256
    $region29: #{tpu_custom_call.1} parent=1 // pred_fallthru
      _
    // Predicated region
    $region30: #{tpu_custom_call.1} parent=1 // pred_check
      _
    $region31: #{tpu_custom_call.1} parent=1 // pred_check_branch
      %63 = sbr.rel (0) target = $region33
    $region32: #{tpu_custom_call.1} parent=1 // pred_region
      %65 = dma.done [#allocation6], 1024
    $region33: #{tpu_custom_call.1} parent=1 // pred_fallthru
      _
    %v67 = vld [vmem:[#allocation2] sm:$0xff]
    %v68 = vpack.c.bf16 %v67, %v67
    %v69 = vld [vmem:[#allocation5] sm:$0xf]
    %v70 = vld [vmem:[#allocation5 + $0x4] sm:$0xf]
    %v71 = vld [vmem:[#allocation5 + $0x8] sm:$0xf]
    %v72 = vld [vmem:[#allocation5 + $0xc] sm:$0xf]
    %v73 = vld [vmem:[%s2] sm:$0x1]
    %v75 = vperm.slane %v73, 0
    %v81 = vunpack.c.l.b16 %v69
    %v82 = vunpack.c.l.b16 %v70
    %v83 = vunpack.c.l.b16 %v71
    %v84 = vunpack.c.l.b16 %v72
    %v85 = vpack.c.b16 %v82, %v81
    %v86 = vpack.c.b16 %v84, %v83
    %vm89 = vcmask 261120
    %v91 = vsel %vm89, %v68, 0
    %93 = vmatpush.bf16.msra.mxu0 0
    %94 = vmatpush.bf16.msra.mxu0 0
    %95 = vmatpush.bf16.msra.mxu0 0
    %96 = vmatpush.bf16.msra.mxu0 0
    %97 = vmatpush.bf16.msra.mxu0 0
    %98 = vmatpush.bf16.msra.mxu0 0
    %99 = vmatpush.bf16.msra.mxu0 %v86
    %100 = vmatpush.bf16.msra.mxu0 %v85
    %101 = vmatmul.bf16.gmra.mxu0 %v91
    %v102 = vpop.f32.mrf.mxu0
    %v103 = vadd.f32 %v75, %v102
    %v104 = vpop.f32.mrf.mxu0
    %105 = vdwg.mxu0
    %v106 = vmax.f32 %v103, 0.0
    %v107 = vpack.c.bf16 %v106, %v106
    %v108 = vld [vmem:[#allocation7] sm:$0xf]
    %v109 = vld [vmem:[#allocation7 + $0x4] sm:$0xf]
    %v110 = vld [vmem:[#allocation7 + $0x8] sm:$0xf]
    %v111 = vld [vmem:[#allocation7 + $0xc] sm:$0xf]
    %v112 = vld [vmem:[#allocation7 + $0x10] sm:$0xf]
    %v113 = vld [vmem:[#allocation7 + $0x14] sm:$0xf]
    %v114 = vld [vmem:[#allocation7 + $0x18] sm:$0xf]
    %v115 = vld [vmem:[#allocation7 + $0x1c] sm:$0xf]
    %v116 = vld [vmem:[#allocation7 + $0x20] sm:$0xf]
    %v117 = vld [vmem:[#allocation7 + $0x24] sm:$0xf]
    %v118 = vld [vmem:[#allocation7 + $0x28] sm:$0xf]
    %v119 = vld [vmem:[#allocation7 + $0x2c] sm:$0xf]
    %v120 = vld [vmem:[#allocation7 + $0x30] sm:$0xf]
    %v121 = vld [vmem:[#allocation7 + $0x34] sm:$0xf]
    %v122 = vld [vmem:[#allocation7 + $0x38] sm:$0xf]
    %v123 = vld [vmem:[#allocation7 + $0x3c] sm:$0xf]
    %v124 = vld [vmem:[%s4] sm:$0x1]
    %v126 = vperm.slane %v124, 0
    %v144 = vunpack.c.l.b16 %v108
    %v145 = vunpack.c.l.b16 %v109
    %v146 = vunpack.c.l.b16 %v110
    %v147 = vunpack.c.l.b16 %v111
    %v148 = vunpack.c.l.b16 %v112
    %v149 = vunpack.c.l.b16 %v113
    %v150 = vunpack.c.l.b16 %v114
    %v151 = vunpack.c.l.b16 %v115
    %v152 = vunpack.c.l.b16 %v116
    %v153 = vunpack.c.l.b16 %v117
    %v154 = vunpack.c.l.b16 %v118
    %v155 = vunpack.c.l.b16 %v119
    %v156 = vunpack.c.l.b16 %v120
    %v157 = vunpack.c.l.b16 %v121
    %v158 = vunpack.c.l.b16 %v122
    %v159 = vunpack.c.l.b16 %v123
    %v160 = vpack.c.b16 %v145, %v144
    %v161 = vpack.c.b16 %v147, %v146
    %v162 = vpack.c.b16 %v149, %v148
    %v163 = vpack.c.b16 %v151, %v150
    %v164 = vpack.c.b16 %v153, %v152
    %v165 = vpack.c.b16 %v155, %v154
    %v166 = vpack.c.b16 %v157, %v156
    %v167 = vpack.c.b16 %v159, %v158
    %176 = vmatpush.bf16.msra.mxu0 %v167
    %177 = vmatpush.bf16.msra.mxu0 %v166
    %178 = vmatpush.bf16.msra.mxu0 %v165
    %179 = vmatpush.bf16.msra.mxu0 %v164
    %180 = vmatpush.bf16.msra.mxu0 %v163
    %181 = vmatpush.bf16.msra.mxu0 %v162
    %182 = vmatpush.bf16.msra.mxu0 %v161
    %183 = vmatpush.bf16.msra.mxu0 %v160
    %184 = vmatmul.bf16.gmra.mxu0 %v107
    %v185 = vpop.f32.mrf.mxu0
    %v186 = vadd.f32 %v126, %v185
    %v187 = vpop.f32.mrf.mxu0
    %188 = vdwg.mxu0
    %189 = vmax.xlane.f32.xlu0 %v186
    %v190 = vpop.xlane.xlu0 %189
    %v191 = vsub.f32 %v186, %v190
    %v192 = vmul.f32 %v191, 1.442695
    %v193 = vpow.pop %v192
    %194 = vadd.xlane.f32.xlu0 %v193
    %v195 = vpop.xlane.xlu0 %194
    %v196 = vlog2.pop %v195
    %v197 = vmul.f32 %v196, 0.6931472
    %v198 = vsub.f32 %v191, %v197
    %vm199 = vcmask 130048
    %200 = vst.msk [vmem:[#allocation8] sm:$0xff] %vm199, %v198
    // Predicated region
    $region34: #{tpu_custom_call.1} parent=1 // pred_check
      _
    $region35: #{tpu_custom_call.1} parent=1 // pred_check_branch
      %202 = sbr.rel (0) target = $region37
    $region36: #{tpu_custom_call.1} parent=1 // pred_region
      %204 = vsyncadd [#allocation4], 0
      %s206 = sshll.u32 [#allocation8], 4
      %s207 = int_to_ptr.vmem [resolvable:$true] %s206
      %s208 = sshll.u32 %s5, 4
      %s209 = int_to_ptr.hbm [resolvable:$true] %s208
      %211 = dma.vmem_to_hbm [thread:$0]  %s207, 128, %s209, [#allocation4]
    $region37: #{tpu_custom_call.1} parent=1 // pred_fallthru
      _
    // Predicated region
    $region38: #{tpu_custom_call.1} parent=1 // pred_check
      _
    $region39: #{tpu_custom_call.1} parent=1 // pred_check_branch
      %213 = sbr.rel (0) target = $region41
    $region40: #{tpu_custom_call.1} parent=1 // pred_region
      %215 = dma.done [#allocation4], 128
    $region41: #{tpu_custom_call.1} parent=1 // pred_fallthru
      _
    %216 = vsyncpa [#allocation3], 1
    %217 = vsyncpa [#allocation6], 1
    %218 = vsyncpa [#allocation4], 1

// kernel: tpu_custom_call.1
$region0: #{tpu_custom_call.1}
  #allocation0 [shape = 'u32[]', space=smem, size = 0x4, offset = 0x4, fixed_abs, tag = 'smem constant byte address 0x4 - core index']
  #allocation1 [shape = 'u32[72,128]{1,0:T(1,128)}', space=vmem, size = 0x9000, scoped, tag = 'internal scratch']
  %s0 = inlined_call_operand.hbm [shape: f32[8,32], index: 0, kind: input, shape index: {}]
  %s1 = inlined_call_operand.hbm [shape: bf16[32,128], index: 1, kind: input, shape index: {}]
  %s2 = inlined_call_operand.vmem [shape: f32[1,128], index: 2, kind: input, shape index: {}]
  %s3 = inlined_call_operand.hbm [shape: bf16[128,128], index: 3, kind: input, shape index: {}]
  %s4 = inlined_call_operand.vmem [shape: f32[1,128], index: 4, kind: input, shape index: {}]
  %s5 = inlined_call_operand.hbm [shape: f32[8,16], index: 5, kind: output, shape index: {}]
  %s6 = sld [smem:[#allocation0]]
  $region42: #{tpu_custom_call.1} parent=0
    _
  %s8 = ssub.s32 1, %s6
  %s9 = scalar_select 0, %s8, %s6
  $region1: #{tpu_custom_call.1} parent=0
    #allocation2 [shape = 'u8[4096]{0}', space=vmem, size = 0x1000, scoped, tag = 'input window, operand 0, single buffered']
    #allocation3 [shape = 's32[1]{0}', space=sflag, size = 0x4, scoped, tag = 'scoped memory for tpu_custom_call.1']
    #allocation4 [shape = 's32[1]{0}', space=sflag, size = 0x4, scoped, tag = 'scoped memory for tpu_custom_call.1']
    #allocation5 [shape = 'u8[8192]{0}', space=vmem, size = 0x2000, scoped, tag = 'input window, operand 1, single buffered']
    #allocation6 [shape = 's32[1]{0}', space=sflag, size = 0x4, scoped, tag = 'scoped memory for tpu_custom_call.1']
    #allocation7 [shape = 'u8[32768]{0}', space=vmem, size = 0x8000, scoped, tag = 'input window, operand 3, single buffered']
    #allocation8 [shape = 'u8[4096]{0}', space=vmem, size = 0x1000, scoped, tag = 'output window, operand 0, single buffered']
    %10 = vsyncpa [#allocation3], 0
    %11 = vsyncpa [#allocation6], 0
    %12 = vsyncpa [#allocation4], 0
    // Predicated region
    $region2: #{tpu_custom_call.1} parent=1 // pred_check
      _
    $region3: #{tpu_custom_call.1} parent=1 // pred_check_branch
      %14 = sbr.rel (0) target = $region5
    $region4: #{tpu_custom_call.1} parent=1 // pred_region
      %16 = vsyncadd [#allocation3], 0
      %s18 = sshll.u32 %s0, 4
      %s19 = int_to_ptr.hbm [resolvable:$true] %s18
      %s20 = sshll.u32 [#allocation2], 4
      %s21 = int_to_ptr.vmem [resolvable:$true] %s20
      %23 = dma.hbm_to_vmem [thread:$0]  %s19, 128, %s21, [#allocation3]
    $region5: #{tpu_custom_call.1} parent=1 // pred_fallthru
      _
    // Predicated region
    $region6: #{tpu_custom_call.1} parent=1 // pred_check
      _
    $region7: #{tpu_custom_call.1} parent=1 // pred_check_branch
      %25 = sbr.rel (0) target = $region9
    $region8: #{tpu_custom_call.1} parent=1 // pred_region
      %27 = vsyncadd [#allocation6], 0
      %s28 = sshll.u32 %s1, 4
      %s29 = int_to_ptr.hbm [resolvable:$true] %s28
      %s30 = sshll.u32 [#allocation5], 4
      %s31 = int_to_ptr.vmem [resolvable:$true] %s30
      %36 = dma.hbm_to_vmem [thread:$0]  %s29, 256, %s31, [#allocation6], 64, 64, 4
    $region9: #{tpu_custom_call.1} parent=1 // pred_fallthru
      _
    // Predicated region
    $region10: #{tpu_custom_call.1} parent=1 // pred_check
      _
    $region11: #{tpu_custom_call.1} parent=1 // pred_check_branch
      %38 = sbr.rel (0) target = $region13
    $region12: #{tpu_custom_call.1} parent=1 // pred_region
      _
    $region13: #{tpu_custom_call.1} parent=1 // pred_fallthru
      _
    // Predicated region
    $region14: #{tpu_custom_call.1} parent=1 // pred_check
      _
    $region15: #{tpu_custom_call.1} parent=1 // pred_check_branch
      %40 = sbr.rel (0) target = $region17
    $region16: #{tpu_custom_call.1} parent=1 // pred_region
      %42 = vsyncadd [#allocation6], 0
      %s43 = sshll.u32 %s3, 4
      %s44 = int_to_ptr.hbm [resolvable:$true] %s43
      %s45 = sshll.u32 [#allocation7], 4
      %s46 = int_to_ptr.vmem [resolvable:$true] %s45
      %51 = dma.hbm_to_vmem [thread:$0]  %s44, 1024, %s46, [#allocation6], 64, 64, 4
    $region17: #{tpu_custom_call.1} parent=1 // pred_fallthru
      _
    // Predicated region
    $region18: #{tpu_custom_call.1} parent=1 // pred_check
      _
    $region19: #{tpu_custom_call.1} parent=1 // pred_check_branch
      %53 = sbr.rel (0) target = $region21
    $region20: #{tpu_custom_call.1} parent=1 // pred_region
      _
    $region21: #{tpu_custom_call.1} parent=1 // pred_fallthru
      _
    // Predicated region
    $region22: #{tpu_custom_call.1} parent=1 // pred_check
      _
    $region23: #{tpu_custom_call.1} parent=1 // pred_check_branch
      %55 = sbr.rel (0) target = $region25
    $region24: #{tpu_custom_call.1} parent=1 // pred_region
      %57 = dma.done [#allocation3], 128
    $region25: #{tpu_custom_call.1} parent=1 // pred_fallthru
      _
    // Predicated region
    $region26: #{tpu_custom_call.1} parent=1 // pred_check
      _
    $region27: #{tpu_custom_call.1} parent=1 // pred_check_branch
      %59 = sbr.rel (0) target = $region29
    $region28: #{tpu_custom_call.1} parent=1 // pred_region
      %61 = dma.done [#allocation6], 256
    $region29: #{tpu_custom_call.1} parent=1 // pred_fallthru
      _
    // Predicated region
    $region30: #{tpu_custom_call.1} parent=1 // pred_check
      _
    $region31: #{tpu_custom_call.1} parent=1 // pred_check_branch
      %63 = sbr.rel (0) target = $region33
    $region32: #{tpu_custom_call.1} parent=1 // pred_region
      %65 = dma.done [#allocation6], 1024
    $region33: #{tpu_custom_call.1} parent=1 // pred_fallthru
      _
    %v67 = vld [vmem:[#allocation2] sm:$0xff]
    %v68 = vpack.c.bf16 %v67, %v67
    %v69 = vld [vmem:[#allocation5] sm:$0xf]
    %v70 = vld [vmem:[#allocation5 + $0x4] sm:$0xf]
    %v71 = vld [vmem:[#allocation5 + $0x8] sm:$0xf]
    %v72 = vld [vmem:[#allocation5 + $0xc] sm:$0xf]
    %v73 = vld [vmem:[%s2] sm:$0x1]
    %v75 = vperm.slane %v73, 0
    %v81 = vunpack.c.l.b16 %v69
    %v82 = vunpack.c.l.b16 %v70
    %v83 = vunpack.c.l.b16 %v71
    %v84 = vunpack.c.l.b16 %v72
    %v85 = vpack.c.b16 %v82, %v81
    %v86 = vpack.c.b16 %v84, %v83
    %vm89 = vcmask 261120
    %v91 = vsel %vm89, %v68, 0
    %93 = vmatpush.bf16.msra.mxu0 0
    %94 = vmatpush.bf16.msra.mxu0 0
    %95 = vmatpush.bf16.msra.mxu0 0
    %96 = vmatpush.bf16.msra.mxu0 0
    %97 = vmatpush.bf16.msra.mxu0 0
    %98 = vmatpush.bf16.msra.mxu0 0
    %99 = vmatpush.bf16.msra.mxu0 %v86
    %100 = vmatpush.bf16.msra.mxu0 %v85
    %101 = vmatmul.bf16.gmra.mxu0 %v91
    %v102 = vpop.f32.mrf.mxu0
    %v103 = vadd.f32 %v75, %v102
    %v104 = vpop.f32.mrf.mxu0
    %105 = vdwg.mxu0
    %v106 = vmax.f32 %v103, 0.0
    %v107 = vpack.c.bf16 %v106, %v106
    %v108 = vld [vmem:[#allocation7] sm:$0xf]
    %v109 = vld [vmem:[#allocation7 + $0x4] sm:$0xf]
    %v110 = vld [vmem:[#allocation7 + $0x8] sm:$0xf]
    %v111 = vld [vmem:[#allocation7 + $0xc] sm:$0xf]
    %v112 = vld [vmem:[#allocation7 + $0x10] sm:$0xf]
    %v113 = vld [vmem:[#allocation7 + $0x14] sm:$0xf]
    %v114 = vld [vmem:[#allocation7 + $0x18] sm:$0xf]
    %v115 = vld [vmem:[#allocation7 + $0x1c] sm:$0xf]
    %v116 = vld [vmem:[#allocation7 + $0x20] sm:$0xf]
    %v117 = vld [vmem:[#allocation7 + $0x24] sm:$0xf]
    %v118 = vld [vmem:[#allocation7 + $0x28] sm:$0xf]
    %v119 = vld [vmem:[#allocation7 + $0x2c] sm:$0xf]
    %v120 = vld [vmem:[#allocation7 + $0x30] sm:$0xf]
    %v121 = vld [vmem:[#allocation7 + $0x34] sm:$0xf]
    %v122 = vld [vmem:[#allocation7 + $0x38] sm:$0xf]
    %v123 = vld [vmem:[#allocation7 + $0x3c] sm:$0xf]
    %v124 = vld [vmem:[%s4] sm:$0x1]
    %v126 = vperm.slane %v124, 0
    %v144 = vunpack.c.l.b16 %v108
    %v145 = vunpack.c.l.b16 %v109
    %v146 = vunpack.c.l.b16 %v110
    %v147 = vunpack.c.l.b16 %v111
    %v148 = vunpack.c.l.b16 %v112
    %v149 = vunpack.c.l.b16 %v113
    %v150 = vunpack.c.l.b16 %v114
    %v151 = vunpack.c.l.b16 %v115
    %v152 = vunpack.c.l.b16 %v116
    %v153 = vunpack.c.l.b16 %v117
    %v154 = vunpack.c.l.b16 %v118
    %v155 = vunpack.c.l.b16 %v119
    %v156 = vunpack.c.l.b16 %v120
    %v157 = vunpack.c.l.b16 %v121
    %v158 = vunpack.c.l.b16 %v122
    %v159 = vunpack.c.l.b16 %v123
    %v160 = vpack.c.b16 %v145, %v144
    %v161 = vpack.c.b16 %v147, %v146
    %v162 = vpack.c.b16 %v149, %v148
    %v163 = vpack.c.b16 %v151, %v150
    %v164 = vpack.c.b16 %v153, %v152
    %v165 = vpack.c.b16 %v155, %v154
    %v166 = vpack.c.b16 %v157, %v156
    %v167 = vpack.c.b16 %v159, %v158
    %176 = vmatpush.bf16.msra.mxu0 %v167
    %177 = vmatpush.bf16.msra.mxu0 %v166
    %178 = vmatpush.bf16.msra.mxu0 %v165
    %179 = vmatpush.bf16.msra.mxu0 %v164
    %180 = vmatpush.bf16.msra.mxu0 %v163
    %181 = vmatpush.bf16.msra.mxu0 %v162
    %182 = vmatpush.bf16.msra.mxu0 %v161
    %183 = vmatpush.bf16.msra.mxu0 %v160
    %184 = vmatmul.bf16.gmra.mxu0 %v107
    %v185 = vpop.f32.mrf.mxu0
    %v186 = vadd.f32 %v126, %v185
    %v187 = vpop.f32.mrf.mxu0
    %188 = vdwg.mxu0
    %189 = vmax.xlane.f32.xlu0 %v186
    %v190 = vpop.xlane.xlu0 %189
    %v191 = vsub.f32 %v186, %v190
    %v192 = vmul.f32 %v191, 1.442695
    %v193 = vpow.pop %v192
    %194 = vadd.xlane.f32.xlu0 %v193
    %v195 = vpop.xlane.xlu0 %194
    %v196 = vlog2.pop %v195
    %v197 = vmul.f32 %v196, 0.6931472
    %v198 = vsub.f32 %v191, %v197
    %vm199 = vcmask 130048
    %200 = vst.msk [vmem:[#allocation8] sm:$0xff] %vm199, %v198
    // Predicated region
    $region34: #{tpu_custom_call.1} parent=1 // pred_check
      _
    $region35: #{tpu_custom_call.1} parent=1 // pred_check_branch
      %202 = sbr.rel (0) target = $region37
    $region36: #{tpu_custom_call.1} parent=1 // pred_region
      %204 = vsyncadd [#allocation4], 0
      %s206 = sshll.u32 [#allocation8], 4
      %s207 = int_to_ptr.vmem [resolvable:$true] %s206
      %s208 = sshll.u32 %s5, 4
      %s209 = int_to_ptr.hbm [resolvable:$true] %s208
      %211 = dma.vmem_to_hbm [thread:$0]  %s207, 128, %s209, [#allocation4]
    $region37: #{tpu_custom_call.1} parent=1 // pred_fallthru
      _
    // Predicated region
    $region38: #{tpu_custom_call.1} parent=1 // pred_check
      _
    $region39: #{tpu_custom_call.1} parent=1 // pred_check_branch
      %213 = sbr.rel (0) target = $region41
    $region40: #{tpu_custom_call.1} parent=1 // pred_region
      %215 = dma.done [#allocation4], 128
    $region41: #{tpu_custom_call.1} parent=1 // pred_fallthru
      _
    %216 = vsyncpa [#allocation3], 1
    %217 = vsyncpa [#allocation6], 1
    %218 = vsyncpa [#allocation4], 1

</llo_original>
